<compile_context>
chip_gen: v5e
topology: v5e:2x2
jax: 0.10.0
libtpu: 0.0.40
codegen_flags: <defaults>
</compile_context>

<pallas_src>
import functools

import jax
import jax.numpy as jnp
from jax import lax
from jax.experimental import pallas as pl
from jax.experimental.pallas import tpu as pltpu

LANE = 128             # TPU lane width
MAX_BLOCK_ROWS = 4096  # 4096 x 128 f32 = 2 MiB per input per grid step


def _round_up(x, m):
    return ((x + m - 1) // m) * m


def _weighted_loss_elems(p, g, *, base_loss, alpha, beta, pos_weight,
                         use_opposite_sign, directional_weight, loss_type,
                         use_eup_recip=False):
    """Elementwise loss(p,g) * weight(p,g) in f32.

    Mirrors SignedFocalLoss.compute_loss before the reduction.  Shared by the Pallas
    kernel body, the ragged lane-tail epilogue and the tiny-input fallback.
    """
    if base_loss == 'bce':
        p = (p + 1.0) * 0.5
        g = (g + 1.0) * 0.5

    d = p - g
    ad = jnp.abs(d)

    # base loss (reduction='none')
    if base_loss == 'l2':
        loss = d * d
    elif base_loss == 'smoothl1':
        loss = jnp.where(ad < 1.0, 0.5 * d * d, ad - 0.5)
    elif base_loss == 'bce':
        log_p = jnp.maximum(jnp.log(p), -100.0)        # PyTorch BCELoss log clamp
        log_1p = jnp.maximum(jnp.log(1.0 - p), -100.0)
        loss = -(g * log_p + (1.0 - g) * log_1p)
    else:  # 'l1'
        loss = ad

    # unsigned_weight = |pred - gt|**beta * alpha   (pure VPU multiplies for beta in {1,2})
    if beta == 1.0:
        uw = ad
    elif beta == 2.0:
        uw = ad * ad
    else:
        uw = ad ** beta
    if alpha != 1.0:
        uw = uw * alpha

    # sign(p)*sign(g) > 0  ==  p*g > 0  (one mul + one compare instead of ~7 VPU ops;
    # only deviates for subnormal products, irrelevant for real data)
    same_sign = (p * g) > 0.0

    if use_opposite_sign:
        w = jnp.where(same_sign, uw, jnp.maximum(uw, 1.0))
    else:
        w = jnp.where(same_sign, uw, jnp.float32(1.0))

    if pos_weight > 1.0:
        w = w * jnp.where(g > 0.0, jnp.float32(pos_weight), jnp.float32(1.0))

    if directional_weight < 1.0:
        good_dir = same_sign & (jnp.abs(p) > jnp.abs(g))
        w = w * jnp.where(good_dir, jnp.float32(directional_weight), jnp.float32(1.0))

    if loss_type == 3:
        denom = jnp.maximum(jnp.abs(p), jnp.abs(g))
        if use_eup_recip:
            # EUP slot (otherwise idle except bce); approx=False keeps numerics close
            # to the reference divide.  0/0 -> NaN matches the PyTorch behavior.
            w = w * pl.reciprocal(denom, approx=False)
        else:
            w = w / denom

    return loss * w


def _signed_focal_kernel(pred_ref, gt_ref, out_ref, *, block_rows, valid_rows,
                         ragged, loss_kwargs):
    i = pl.program_id(0)

    p = pred_ref[...].astype(jnp.float32)
    g = gt_ref[...].astype(jnp.float32)
    loss = _weighted_loss_elems(p, g, use_eup_recip=True, **loss_kwargs)

    def partial_sum(x):
        # Group sublane tiles and add vreg-wise (pure VPU) -> one (8,128) slab per step.
        # The single cross-lane reduce happens once, outside, on the tiny partials array.
        return jnp.sum(x.reshape(block_rows // 8, 8, LANE), axis=0)

    out_ref[...] = partial_sum(loss)

    if ragged:
        # Only the last grid block can contain garbage rows (uninitialized VMEM past the
        # end of the array).  Mask + overwrite there only, so the iota/compare/select work
        # stays off every other block (VALU is the tight slot on v6e/v7x).
        @pl.when(i == pl.num_programs(0) - 1)
        def _():
            row = lax.broadcasted_iota(jnp.int32, loss.shape, 0) + i * block_rows
            # jnp.where select: NaNs from garbage rows never reach the sum.
            masked = jnp.where(row < valid_rows, loss, 0.0)
            out_ref[...] = partial_sum(masked)


def signed_focal_loss(pred, gt, *, loss_type=1, base_loss='l1', alpha=1.0,
                      beta=1.0, pos_weight=1.0, use_opposite_sign=True,
                      directional_weight=1.0, am_constant=0.0):
    """Pallas implementation of SignedFocalLoss.forward. Returns a scalar f32."""
    assert pred.shape == gt.shape
    if am_constant > 0.1:
        # TODO(synk): adaptive-margin filtering (am_constant>0.1) needs a data-dependent
        # mean over negative-sample losses (second pass + different normalization).
        raise NotImplementedError("am_constant > 0.1 path not implemented in Pallas kernel")

    loss_kwargs = dict(
        base_loss=base_loss, alpha=float(alpha), beta=float(beta),
        pos_weight=float(pos_weight), use_opposite_sign=bool(use_opposite_sign),
        directional_weight=float(directional_weight), loss_type=int(loss_type))

    total = int(pred.size)
    f32 = jnp.float32

    pred_f = jnp.ravel(pred)   # contiguous reshape: bitcast, no HBM copy
    gt_f = jnp.ravel(gt)

    # sublane multiple for the input block (bf16/f16 pack 16 sublanes per vreg)
    sub = 8 if (pred_f.dtype == jnp.float32 and gt_f.dtype == jnp.float32) else 16

    # Lane-ragged tail (<128 elems): handled in a tiny pure-JAX epilogue so the kernel
    # stays lane-dense and — in the common lane-aligned 5-D case — zero wrapper copies.
    lane_rem = total % LANE
    main = total - lane_rem
    tail_sum = jnp.array(0.0, f32)
    if lane_rem:
        tail_p = lax.slice(pred_f, (main,), (total,)).astype(f32)
        tail_g = lax.slice(gt_f, (main,), (total,)).astype(f32)
        tail_sum = jnp.sum(_weighted_loss_elems(tail_p, tail_g, **loss_kwargs))
        # Rare path for 5-D volumes; prefix slice may still cost one copy of `main` elems
        # (strictly less work than the previous pad of both full arrays).
        pred_f = lax.slice(pred_f, (0,), (main,))
        gt_f = lax.slice(gt_f, (0,), (main,))

    rows = main // LANE

    if rows < 2 * sub:
        # Tiny input: a kernel launch isn't worth it.
        main_sum = jnp.array(0.0, f32)
        if main:
            main_sum = jnp.sum(_weighted_loss_elems(
                pred_f.astype(f32), gt_f.astype(f32), **loss_kwargs))
        return (main_sum + tail_sum) / jnp.float32(total)

    pred2 = pred_f.reshape(rows, LANE)   # contiguous reshape: free
    gt2 = gt_f.reshape(rows, LANE)

    # Block sizing: up to 2 MiB/input/step (HBM-roofline plateau), but always >= 2 blocks
    # so both v7x TensorCores get work through the "parallel" grid axis.
    block_rows = min(MAX_BLOCK_ROWS, _round_up(pl.cdiv(rows, 2), sub))
    num_blocks = pl.cdiv(rows, block_rows)
    ragged = (rows % block_rows) != 0

    kernel = functools.partial(
        _signed_focal_kernel,
        block_rows=block_rows, valid_rows=rows, ragged=ragged, loss_kwargs=loss_kwargs)

    in_spec = pl.BlockSpec((block_rows, LANE), lambda i: (i, 0))
    out_spec = pl.BlockSpec((8, LANE), lambda i: (i, 0))

    in_bytes = (jnp.dtype(pred2.dtype).itemsize + jnp.dtype(gt2.dtype).itemsize) * main
    cost = pl.CostEstimate(
        flops=30 * main,
        transcendentals=(2 * main) if base_loss == 'bce' else 0,
        bytes_accessed=in_bytes + 4 * num_blocks * 8 * LANE)

    partials = pl.pallas_call(
        kernel,
        out_shape=jax.ShapeDtypeStruct((num_blocks * 8, LANE), jnp.float32),
        grid_spec=pltpu.PrefetchScalarGridSpec(
            num_scalar_prefetch=0,
            grid=(num_blocks,),
            in_specs=[in_spec, in_spec],
            out_specs=out_spec,
        ),
        compiler_params=pltpu.CompilerParams(
            dimension_semantics=("parallel",)),
        cost_estimate=cost,
    )(pred2, gt2)

    # Tiny final reduction + mean normalization (global mean == (1/C) * sum of per-channel means).
    return (jnp.sum(partials) + tail_sum) / jnp.float32(total)


def signed_focal_loss_ref(pred, gt, *, loss_type=1, base_loss='l1', alpha=1.0,
                          beta=1.0, pos_weight=1.0, use_opposite_sign=True,
                          directional_weight=1.0, am_constant=0.0):
    """Pure-JAX reference faithfully mirroring the PyTorch module (per-channel loop,
    sign()*sign(), pow, true divide) — kept independent of the kernel's rewrites."""
    assert am_constant <= 0.1

    def compute_loss(p, g):
        if base_loss == 'bce':
            p = (p + 1.0) / 2.0
            g = (g + 1.0) / 2.0
        d = p - g
        ad = jnp.abs(d)
        if base_loss == 'l2':
            loss = d * d
        elif base_loss == 'smoothl1':
            loss = jnp.where(ad < 1.0, 0.5 * d * d, ad - 0.5)
        elif base_loss == 'bce':
            loss = -(g * jnp.maximum(jnp.log(p), -100.0)
                     + (1.0 - g) * jnp.maximum(jnp.log(1.0 - p), -100.0))
        else:
            loss = ad
        pos_mask = g > 0
        uw = ad ** beta * alpha
        same_sign = jnp.sign(p) * jnp.sign(g) > 0
        sw = jnp.maximum(uw, 1.0) if use_opposite_sign else jnp.ones_like(g)
        w = jnp.where(same_sign, uw, sw)
        if pos_weight > 1.0:
            w = w * jnp.where(pos_mask, pos_weight, 1.0)
        if directional_weight < 1.0:
            good = same_sign & (jnp.abs(p) > jnp.abs(g))
            w = w * jnp.where(good, directional_weight, 1.0)
        if loss_type == 3:
            w = w / jnp.maximum(jnp.abs(p), jnp.abs(g))
        return jnp.mean(loss * w, axis=(0, 2, 3, 4))

    C = gt.shape[1]
    acc = 0.0
    for i in range(C):
        acc = acc + compute_loss(pred[:, i:i + 1], gt[:, i:i + 1])
    return (acc / C)[0]


if __name__ == "__main__":
    key = jax.random.PRNGKey(0)
    k1, k2 = jax.random.split(key)

    # 5-D (N, C, D, H, W) like the PyTorch module's forward expects.
    N, C, D, H, W = 2, 4, 4, 16, 16
    pred = jax.random.uniform(k1, (N, C, D, H, W), jnp.float32, minval=-1.0, maxval=1.0)
    gt = jax.random.uniform(k2, (N, C, D, H, W), jnp.float32, minval=-1.0, maxval=1.0)

    configs = [
        dict(),  # module defaults: l1, loss_type=1, alpha=beta=1, use_opposite_sign=True
        dict(base_loss='l2', beta=2.0, pos_weight=2.0,
             directional_weight=0.5, loss_type=3),
        dict(base_loss='smoothl1', alpha=0.5, use_opposite_sign=False),
        dict(base_loss='bce'),
    ]
    for cfg in configs:
        out = jax.block_until_ready(signed_focal_loss(pred, gt, **cfg))
        ref = signed_focal_loss_ref(pred, gt, **cfg)
        assert jnp.allclose(out, ref, rtol=1e-5, atol=1e-5), (cfg, out, ref)

    # Ragged shape: exercises the lane-tail epilogue and the pl.when-gated last block mask.
    k3, k4 = jax.random.split(k2)
    pred_r = jax.random.uniform(k3, (2, 3, 4, 15, 17), jnp.float32, minval=-1.0, maxval=1.0)
    gt_r = jax.random.uniform(k4, (2, 3, 4, 15, 17), jnp.float32, minval=-1.0, maxval=1.0)
    for cfg in [dict(),
                dict(base_loss='l2', beta=2.0, pos_weight=2.0,
                     directional_weight=0.5, loss_type=3)]:
        out = jax.block_until_ready(signed_focal_loss(pred_r, gt_r, **cfg))
        ref = signed_focal_loss_ref(pred_r, gt_r, **cfg)
        assert jnp.allclose(out, ref, rtol=1e-5, atol=1e-5), (cfg, out, ref)

    # bf16 inputs stream at half the HBM bytes; kernel accumulates in f32.
    out = jax.block_until_ready(
        signed_focal_loss(pred.astype(jnp.bfloat16), gt.astype(jnp.bfloat16)))
    ref = signed_focal_loss_ref(pred.astype(jnp.bfloat16).astype(jnp.float32),
                                gt.astype(jnp.bfloat16).astype(jnp.float32))
    assert jnp.allclose(out, ref, rtol=1e-5, atol=1e-5), (out, ref)

    print("KERNEL_OK")
</pallas_src>

<mosaic_0001>
module attributes {stable_mosaic.version = 11 : i64} {
  func.func @_signed_focal_kernel(%arg0: i32, %arg1: memref<32x128xf32, #tpu.memory_space<vmem>>, %arg2: memref<32x128xf32, #tpu.memory_space<vmem>>, %arg3: memref<8x128xf32, #tpu.memory_space<vmem>>) attributes {dimension_semantics = [#tpu.dimension_semantics<parallel>], iteration_bounds = array<i64: 2>, scalar_prefetch = 0 : i64, scratch_operands = 0 : i64, tpu.core_type = #tpu.core_type<tc>, window_params = [{transform_indices = @transform_0, window_bounds = array<i64: 32, 128>}, {transform_indices = @transform_1, window_bounds = array<i64: 32, 128>}, {transform_indices = @transform_2, window_bounds = array<i64: 8, 128>}]} {
    %c0 = arith.constant 0 : index
    %c0_0 = arith.constant 0 : index
    %0 = vector.load %arg1[%c0, %c0_0] : memref<32x128xf32, #tpu.memory_space<vmem>>, vector<32x128xf32>
    %c0_1 = arith.constant 0 : index
    %c0_2 = arith.constant 0 : index
    %1 = vector.load %arg2[%c0_1, %c0_2] : memref<32x128xf32, #tpu.memory_space<vmem>>, vector<32x128xf32>
    %2 = arith.subf %0, %1 : vector<32x128xf32>
    %3 = math.absf %2 : vector<32x128xf32>
    %4 = arith.mulf %0, %1 : vector<32x128xf32>
    %cst = arith.constant 0.000000e+00 : f32
    %5 = vector.broadcast %cst : f32 to vector<32x128xf32>
    %6 = arith.cmpf ogt, %4, %5 : vector<32x128xf32>
    %cst_3 = arith.constant 1.000000e+00 : f32
    %7 = vector.broadcast %cst_3 : f32 to vector<32x128xf32>
    %8 = arith.maximumf %3, %7 : vector<32x128xf32>
    %9 = arith.select %6, %3, %8 : vector<32x128xi1>, vector<32x128xf32>
    %10 = arith.mulf %3, %9 : vector<32x128xf32>
    %11 = vector.shape_cast %10 : vector<32x128xf32> to vector<4x8x128xf32>
    %cst_4 = arith.constant dense<0.000000e+00> : vector<8x128xf32>
    %12 = vector.multi_reduction <add>, %11, %cst_4 [0] : vector<4x8x128xf32> to vector<8x128xf32>
    %c0_5 = arith.constant 0 : index
    %c0_6 = arith.constant 0 : index
    %13 = vector.load %arg3[%c0_5, %c0_6] : memref<8x128xf32, #tpu.memory_space<vmem>>, vector<8x128xf32>
    tpu.vector_store %arg3[%c0_5, %c0_6], %12 {strides = array<i32>} : memref<8x128xf32, #tpu.memory_space<vmem>>, vector<8x128xf32>,
    return
  }
  func.func @transform_0(%arg0: i32) -> (i32, i32) {
    %c0_i32 = arith.constant 0 : i32
    %c0_i32_0 = arith.constant 0 : i32
    return %arg0, %c0_i32 : i32, i32
  }
  func.func @transform_1(%arg0: i32) -> (i32, i32) {
    %c0_i32 = arith.constant 0 : i32
    %c0_i32_0 = arith.constant 0 : i32
    return %arg0, %c0_i32 : i32, i32
  }
  func.func @transform_2(%arg0: i32) -> (i32, i32) {
    %c0_i32 = arith.constant 0 : i32
    %c0_i32_0 = arith.constant 0 : i32
    return %arg0, %c0_i32 : i32, i32
  }
}

</mosaic_0001>

<llo_original>
// kernel: tpu_custom_call.1
$region0: #{tpu_custom_call.1}
  #allocation0 [shape = 'u32[]', space=smem, size = 0x4, offset = 0x4, fixed_abs, tag = 'smem constant byte address 0x4 - core index']
  #allocation1 [shape = 'u32[72,128]{1,0:T(1,128)}', space=vmem, size = 0x9000, scoped, tag = 'internal scratch']
  %s0 = inlined_call_operand.hbm [shape: f32[64,128], index: 0, kind: input, shape index: {}]
  %s1 = inlined_call_operand.hbm [shape: f32[64,128], index: 1, kind: input, shape index: {}]
  %s2 = inlined_call_operand.hbm [shape: f32[16,128], index: 2, kind: output, shape index: {}]
  %s3 = sld [smem:[#allocation0]]
  $region49: #{tpu_custom_call.1} parent=0
    _
  %s5 = ssub.s32 1, %s3
  %s6 = scalar_select 0, %s5, %s3
  $region1: #{tpu_custom_call.1} parent=0
    #allocation2 [shape = 'u8[32768]{0}', space=vmem, size = 0x8000, scoped, tag = 'input window, operand 0']
    #allocation3 [shape = 's32[2]{0}', space=sflag, size = 0x8, scoped, tag = 'scoped memory for tpu_custom_call.1']
    #allocation4 [shape = 's32[2]{0}', space=sflag, size = 0x8, scoped, tag = 'scoped memory for tpu_custom_call.1']
    #allocation5 [shape = 'u8[32768]{0}', space=vmem, size = 0x8000, scoped, tag = 'input window, operand 1']
    #allocation6 [shape = 's32[2]{0}', space=sflag, size = 0x8, scoped, tag = 'scoped memory for tpu_custom_call.1']
    #allocation7 [shape = 'u8[8192]{0}', space=vmem, size = 0x2000, scoped, tag = 'output window, operand 0']
    %7 = vsyncpa [#allocation3], 0
    %s8 = scalar_lea.sflag [#allocation3], 1
    %9 = vsyncpa %s8, 0
    %10 = vsyncpa [#allocation6], 0
    %s11 = scalar_lea.sflag [#allocation6], 1
    %12 = vsyncpa %s11, 0
    %13 = vsyncpa [#allocation4], 0
    %s14 = scalar_lea.sflag [#allocation4], 1
    %15 = vsyncpa %s14, 0
    loop: start=0, step=1, limit=4
    $region2: #{tpu_custom_call.1} parent=1 // loop_pre_header
      _
    $region3: #{tpu_custom_call.1} parent=1 // loop_header
      %s17 = sphi 0, %s21
      %p18 = scmp.ge.s32.totalorder %s17, 4
      %s27 = sphi 0, %s29
      %s30 = sphi 0, %s27
      %s31 = sphi 0, %s30
      %s47 = sphi 0, %s31
      %s53 = sphi 0, %s55
      %s56 = sphi 0, %s53
      %s57 = sphi 0, %s56
      %s73 = sphi 0, %s57
      %s79 = sphi 0, %s81
      %s82 = sphi 0, %s79
      %s83 = sphi 0, %s82
      %s99 = sphi 0, %s83
    $region4: #{tpu_custom_call.1} parent=1 // loop_header_branch
      %20 = sbr.rel (%p18) target = $region8
    $region5: #{tpu_custom_call.1} parent=1 // loop_body
      %s22 = ssub.s32 %s17, 1
      %s23 = ssub.s32 %s17, 2
      %s24 = sadd.s32 %s17, 1
      %s25 = ssub.s32 %s17, %s24
      %p26 = scmp.eq.s32.totalorder %s25, 0
      %s28 = sadd.s32 %s27, 1
      %s29 = scalar_select %p26, %s27, %s28
      %p32 = pneg %p26
      %p33 = scmp.eq.s32.totalorder %s17, 1
      %p34 = por %p32, %p33
      %p35 = scmp.ne.s32.totalorder %s27, %s30
      %p36 = scmp.eq.s32.totalorder %s17, 0
      %p37 = por %p35, %p36
      %p38 = scmp.ne.s32.totalorder %s27, %s30
      %p39 = scmp.eq.s32.totalorder %s22, 1
      %p40 = por %p38, %p39
      %p41 = scmp.ne.s32.totalorder %s30, %s31
      %p42 = scmp.eq.s32.totalorder %s22, 0
      %p43 = por %p41, %p42
      %p44 = scmp.ne.s32.totalorder %s30, %s31
      %p45 = scmp.eq.s32.totalorder %s23, 1
      %p46 = por %p44, %p45
      %p48 = scmp.ne.s32.totalorder %s31, %s47
      %p49 = scmp.eq.s32.totalorder %s23, 0
      %p50 = por %p48, %p49
      %s51 = ssub.s32 %s17, %s24
      %p52 = scmp.eq.s32.totalorder %s51, 0
      %s54 = sadd.s32 %s53, 1
      %s55 = scalar_select %p52, %s53, %s54
      %p58 = pneg %p52
      %p59 = scmp.eq.s32.totalorder %s17, 1
      %p60 = por %p58, %p59
      %p61 = scmp.ne.s32.totalorder %s53, %s56
      %p62 = scmp.eq.s32.totalorder %s17, 0
      %p63 = por %p61, %p62
      %p64 = scmp.ne.s32.totalorder %s53, %s56
      %p65 = scmp.eq.s32.totalorder %s22, 1
      %p66 = por %p64, %p65
      %p67 = scmp.ne.s32.totalorder %s56, %s57
      %p68 = scmp.eq.s32.totalorder %s22, 0
      %p69 = por %p67, %p68
      %p70 = scmp.ne.s32.totalorder %s56, %s57
      %p71 = scmp.eq.s32.totalorder %s23, 1
      %p72 = por %p70, %p71
      %p74 = scmp.ne.s32.totalorder %s57, %s73
      %p75 = scmp.eq.s32.totalorder %s23, 0
      %p76 = por %p74, %p75
      %s77 = ssub.s32 %s17, %s24
      %p78 = scmp.eq.s32.totalorder %s77, 0
      %s80 = sadd.s32 %s79, 1
      %s81 = scalar_select %p78, %s79, %s80
      %p84 = pneg %p78
      %p85 = scmp.eq.s32.totalorder %s17, 1
      %p86 = por %p84, %p85
      %p87 = scmp.ne.s32.totalorder %s79, %s82
      %p88 = scmp.eq.s32.totalorder %s17, 0
      %p89 = por %p87, %p88
      %p90 = scmp.ne.s32.totalorder %s79, %s82
      %p91 = scmp.eq.s32.totalorder %s22, 1
      %p92 = por %p90, %p91
      %p93 = scmp.ne.s32.totalorder %s82, %s83
      %p94 = scmp.eq.s32.totalorder %s22, 0
      %p95 = por %p93, %p94
      %p96 = scmp.ne.s32.totalorder %s82, %s83
      %p97 = scmp.eq.s32.totalorder %s23, 1
      %p98 = por %p96, %p97
      %p100 = scmp.ne.s32.totalorder %s83, %s99
      %p101 = scmp.eq.s32.totalorder %s23, 0
      %p102 = por %p100, %p101
      %p103 = scmp.le.s32.totalorder 1, %s17
      %p104 = scmp.lt.s32.totalorder %s17, 3
      %p105 = pnand %p103, %p104
      %p106 = pneg %p105
      // Predicated region
      $region9: #{tpu_custom_call.1} parent=5 // pred_check
        _
      $region10: #{tpu_custom_call.1} parent=5 // pred_check_branch
        %108 = sbr.rel (%p105) target = $region12
      $region11: #{tpu_custom_call.1} parent=5 // pred_region
        %s109 = ssub.s32 %s17, 1
      $region12: #{tpu_custom_call.1} parent=5 // pred_fallthru
        _
      %p110 = scmp.lt.s32.totalorder %s17, 2
      // Predicated region
      $region13: #{tpu_custom_call.1} parent=5 // pred_check
        %p111 = pneg %p110
      $region14: #{tpu_custom_call.1} parent=5 // pred_check_branch
        %113 = sbr.rel (%p111) target = $region16
      $region15: #{tpu_custom_call.1} parent=5 // pred_region
        // Predicated region
        $region17: #{tpu_custom_call.1} parent=15 // pred_check
          %p114 = pneg %p37
        $region18: #{tpu_custom_call.1} parent=15 // pred_check_branch
          %116 = sbr.rel (%p114) target = $region20
        $region19: #{tpu_custom_call.1} parent=15 // pred_region
          %s117 = sand.u32 %s27, 1
          %s118 = scalar_lea.sflag [#allocation3], %s117
          %s119 = sand.u32 %s27, 1
          %s120 = smul.addr %s119, 32
          %s121 = scalar_lea.vmem [#allocation2], %s120
          %s122 = smul.u32 4, %s17
          %124 = vsyncadd %s118, 0
          %s125 = smul.addr %s122, 8
          %s126 = scalar_lea.hbm %s0, %s125
          %s127 = sshll.u32 %s126, 4
          %s128 = int_to_ptr.hbm [resolvable:$true] %s127
          %s129 = sshll.u32 %s121, 4
          %s130 = int_to_ptr.vmem [resolvable:$true] %s129
          %135 = dma.hbm_to_vmem [thread:$0]  %s128, 512, %s130, %s118, 128, 128, 8
        $region20: #{tpu_custom_call.1} parent=15 // pred_fallthru
          _
        // Predicated region
        $region21: #{tpu_custom_call.1} parent=15 // pred_check
          %p136 = pneg %p63
        $region22: #{tpu_custom_call.1} parent=15 // pred_check_branch
          %138 = sbr.rel (%p136) target = $region24
        $region23: #{tpu_custom_call.1} parent=15 // pred_region
          %s139 = sand.u32 %s53, 1
          %s140 = scalar_lea.sflag [#allocation6], %s139
          %s141 = sand.u32 %s53, 1
          %s142 = smul.addr %s141, 32
          %s143 = scalar_lea.vmem [#allocation5], %s142
          %s144 = smul.u32 4, %s17
          %146 = vsyncadd %s140, 0
          %s147 = smul.addr %s144, 8
          %s148 = scalar_lea.hbm %s1, %s147
          %s149 = sshll.u32 %s148, 4
          %s150 = int_to_ptr.hbm [resolvable:$true] %s149
          %s151 = sshll.u32 %s143, 4
          %s152 = int_to_ptr.vmem [resolvable:$true] %s151
          %157 = dma.hbm_to_vmem [thread:$0]  %s150, 512, %s152, %s140, 128, 128, 8
        $region24: #{tpu_custom_call.1} parent=15 // pred_fallthru
          _
      $region16: #{tpu_custom_call.1} parent=5 // pred_fallthru
        _
      %p158 = scmp.le.s32.totalorder 1, %s17
      %p159 = scmp.lt.s32.totalorder %s17, 3
      %p160 = pnand %p158, %p159
      %p161 = pneg %p160
      // Predicated region
      $region25: #{tpu_custom_call.1} parent=5 // pred_check
        _
      $region26: #{tpu_custom_call.1} parent=5 // pred_check_branch
        %163 = sbr.rel (%p160) target = $region28
      $region27: #{tpu_custom_call.1} parent=5 // pred_region
        %s164 = ssub.s32 %s17, 1
        %s165 = sand.u32 %s30, 1
        %s166 = scalar_lea.sflag [#allocation3], %s165
        %s167 = sand.u32 %s30, 1
        %s168 = smul.addr %s167, 32
        %s169 = scalar_lea.vmem [#allocation2], %s168
        // Predicated region
        $region29: #{tpu_custom_call.1} parent=27 // pred_check
          %p170 = pneg %p43
        $region30: #{tpu_custom_call.1} parent=27 // pred_check_branch
          %172 = sbr.rel (%p170) target = $region32
        $region31: #{tpu_custom_call.1} parent=27 // pred_region
          %174 = dma.done %s166, 512
        $region32: #{tpu_custom_call.1} parent=27 // pred_fallthru
          _
        %s175 = sand.u32 %s56, 1
        %s176 = scalar_lea.sflag [#allocation6], %s175
        %s177 = sand.u32 %s56, 1
        %s178 = smul.addr %s177, 32
        %s179 = scalar_lea.vmem [#allocation5], %s178
        // Predicated region
        $region33: #{tpu_custom_call.1} parent=27 // pred_check
          %p180 = pneg %p69
        $region34: #{tpu_custom_call.1} parent=27 // pred_check_branch
          %182 = sbr.rel (%p180) target = $region36
        $region35: #{tpu_custom_call.1} parent=27 // pred_region
          %184 = dma.done %s176, 512
        $region36: #{tpu_custom_call.1} parent=27 // pred_fallthru
          _
        %s185 = sand.u32 %s30, 1
        %s186 = scalar_lea.sflag [#allocation3], %s185
        %s187 = sand.u32 %s30, 1
        %s188 = smul.addr %s187, 32
        %s189 = scalar_lea.vmem [#allocation2], %s188
        %p190 = pneg %p43
        %p191 = pneg %p40
        %s192 = sand.u32 %s56, 1
        %s193 = scalar_lea.sflag [#allocation6], %s192
        %s194 = sand.u32 %s56, 1
        %s195 = smul.addr %s194, 32
        %s196 = scalar_lea.vmem [#allocation5], %s195
        %p197 = pneg %p69
        %p198 = pneg %p66
        %p199 = pneg %p95
        %p200 = pneg %p92
        %s201 = sand.u32 %s82, 1
        %s202 = scalar_lea.sflag [#allocation4], %s201
        %s203 = sand.u32 %s82, 1
        %s204 = smul.addr %s203, 8
        %s205 = scalar_lea.vmem [#allocation7], %s204
        %s206 = smul.u32 4, %s22
        %s207 = smul.u32 4, %s22
        %v208 = vld [vmem:[%s169] sm:$0xff]
        %v209 = vld [vmem:[%s169 + $0x8] sm:$0xff]
        %v210 = vld [vmem:[%s169 + $0x10] sm:$0xff]
        %v211 = vld [vmem:[%s169 + $0x18] sm:$0xff]
        %v212 = vld [vmem:[%s179] sm:$0xff]
        %v213 = vld [vmem:[%s179 + $0x8] sm:$0xff]
        %v214 = vld [vmem:[%s179 + $0x10] sm:$0xff]
        %v215 = vld [vmem:[%s179 + $0x18] sm:$0xff]
        %v216 = vsub.f32 %v208, %v212
        %v217 = vsub.f32 %v209, %v213
        %v218 = vsub.f32 %v210, %v214
        %v219 = vsub.f32 %v211, %v215
        %v220 = vand.u32 2147483647, %v216
        %v221 = vand.u32 2147483647, %v217
        %v222 = vand.u32 2147483647, %v218
        %v223 = vand.u32 2147483647, %v219
        %v224 = vmul.f32 %v208, %v212
        %v225 = vmul.f32 %v209, %v213
        %v226 = vmul.f32 %v210, %v214
        %v227 = vmul.f32 %v211, %v215
        %vm228 = vcmp.gt.f32.partialorder %v224, 0.0
        %vm229 = vcmp.gt.f32.partialorder %v225, 0.0
        %vm230 = vcmp.gt.f32.partialorder %v226, 0.0
        %vm231 = vcmp.gt.f32.partialorder %v227, 0.0
        %v232 = vmax.f32 %v220, 1.0
        %v233 = vmax.f32 %v221, 1.0
        %v234 = vmax.f32 %v222, 1.0
        %v235 = vmax.f32 %v223, 1.0
        %v236 = vsel %vm228, %v220, %v232
        %v237 = vsel %vm229, %v221, %v233
        %v238 = vsel %vm230, %v222, %v234
        %v239 = vsel %vm231, %v223, %v235
        %v240 = vmul.f32 %v220, %v236
        %v241 = vmul.f32 %v221, %v237
        %v242 = vmul.f32 %v222, %v238
        %v243 = vmul.f32 %v223, %v239
        %v244 = vadd.f32 %v240, %v241
        %v245 = vadd.f32 %v244, %v242
        %v246 = vadd.f32 %v245, %v243
        %247 = vst [vmem:[%s205] sm:$0xff] %v246
        %s248 = sand.u32 %s82, 1
        %s249 = scalar_lea.sflag [#allocation4], %s248
        %s250 = sand.u32 %s82, 1
        %s251 = smul.addr %s250, 8
        %s252 = scalar_lea.vmem [#allocation7], %s251
        // Predicated region
        $region37: #{tpu_custom_call.1} parent=27 // pred_check
          %p253 = pneg %p92
        $region38: #{tpu_custom_call.1} parent=27 // pred_check_branch
          %255 = sbr.rel (%p253) target = $region40
        $region39: #{tpu_custom_call.1} parent=27 // pred_region
          %257 = vsyncadd %s249, 0
          %s258 = smul.addr %s22, 8
          %s259 = scalar_lea.hbm %s2, %s258
          %s261 = sshll.u32 %s252, 4
          %s262 = int_to_ptr.vmem [resolvable:$true] %s261
          %s263 = sshll.u32 %s259, 4
          %s264 = int_to_ptr.hbm [resolvable:$true] %s263
          %266 = dma.vmem_to_hbm [thread:$0]  %s262, 128, %s264, %s249
        $region40: #{tpu_custom_call.1} parent=27 // pred_fallthru
          _
      $region28: #{tpu_custom_call.1} parent=5 // pred_fallthru
        _
      %p267 = scmp.le.s32.totalorder 2, %s17
      // Predicated region
      $region41: #{tpu_custom_call.1} parent=5 // pred_check
        %p268 = pneg %p267
      $region42: #{tpu_custom_call.1} parent=5 // pred_check_branch
        %270 = sbr.rel (%p268) target = $region44
      $region43: #{tpu_custom_call.1} parent=5 // pred_region
        %s271 = ssub.s32 %s17, 2
        // Predicated region
        $region45: #{tpu_custom_call.1} parent=43 // pred_check
          %p272 = pneg %p98
        $region46: #{tpu_custom_call.1} parent=43 // pred_check_branch
          %274 = sbr.rel (%p272) target = $region48
        $region47: #{tpu_custom_call.1} parent=43 // pred_region
          %s275 = sand.u32 %s83, 1
          %s276 = scalar_lea.sflag [#allocation4], %s275
          %s277 = sand.u32 %s83, 1
          %s278 = smul.addr %s277, 8
          %s279 = scalar_lea.vmem [#allocation7], %s278
          %281 = dma.done %s276, 128
        $region48: #{tpu_custom_call.1} parent=43 // pred_fallthru
          _
      $region44: #{tpu_custom_call.1} parent=5 // pred_fallthru
        _
    $region6: #{tpu_custom_call.1} parent=1 // loop_footer
      %s21 = sadd.s32 1, %s17
    $region7: #{tpu_custom_call.1} parent=1 // loop_footer_branch
      %16 = sbr.rel target = $region3
    $region8: #{tpu_custom_call.1} parent=1 // loop_exit
      _
    %282 = vsyncpa [#allocation3], 1
    %s283 = scalar_lea.sflag [#allocation3], 1
    %284 = vsyncpa %s283, 1
    %285 = vsyncpa [#allocation6], 1
    %s286 = scalar_lea.sflag [#allocation6], 1
    %287 = vsyncpa %s286, 1
    %288 = vsyncpa [#allocation4], 1
    %s289 = scalar_lea.sflag [#allocation4], 1
    %290 = vsyncpa %s289, 1

</llo_original>
